<compile_context>
chip_gen: v6e
topology: v6e:2x2x1
jax: 0.10.0
libtpu: 0.0.40
codegen_flags: <defaults>
</compile_context>

<pallas_src>
import itertools

import numpy as np
import jax
import jax.numpy as jnp
from jax.experimental import pallas as pl
from jax.experimental.pallas import tpu as pltpu


def make_antecedent_layer(mf_indices, num_mfs, *, batch_tile=128, rule_tile=512):
    """Build the Pallas forward pass for _AntecedentLayer.

    mf_indices : (R, V) int array — cartesian product of per-variable MF indices
                 (the static layer data built in __init__ via itertools.product).
    num_mfs    : M, the (padded) number of MFs per variable, i.e. x.shape[2].
    Returns a jit-compiled callable: x (B, V, M) float32 -> (B, R) float32.
    """
    idx = np.asarray(mf_indices)
    R, V = idx.shape
    M = int(num_mfs)
    Rp = ((R + 127) // 128) * 128                    # lane-dense padded rule count

    # One-hot selector, host-built once: sel[v*M + m, r] = 1.0 iff idx[r, v] == m.
    # Rules on the lane axis; padded rule columns (r >= R) stay all-zero.
    sel_np = np.zeros((V * M, Rp), dtype=np.float32)
    for v in range(V):
        sel_np[v * M + idx[:, v], np.arange(R)] = 1.0
    sel = jnp.asarray(sel_np)

    # Tile caps (feedback: TB 128-256, TR 512-2048; kept at the small end here).
    tb_cap = max(8, (int(batch_tile) // 8) * 8)
    tr_cap = max(128, (int(rule_tile) // 128) * 128)
    TR = min(Rp, tr_cap)

    def forward(x):
        B, Vx, Mx = x.shape
        assert (Vx, Mx) == (V, M), "x shape does not match the rule index table"
        x2 = x.reshape(B, V * M).astype(jnp.float32)
        TB = B if B <= tb_cap else tb_cap            # full dim or a multiple of 8
        grid = (pl.cdiv(B, TB), pl.cdiv(Rp, TR))

        def kernel(x_ref, sel_ref, out_ref):
            blk = out_ref.shape                      # (TB, TR)
            rules = None
            for v in range(V):
                base = v * M
                # Init with the m=0 column; every real rule lane whose MF index is
                # m > 0 is overwritten by exactly one select below (exact gather).
                ant = jnp.broadcast_to(x_ref[:, base:base + 1], blk)
                for m in range(1, M):
                    c = base + m
                    # f32 row broadcast (replicated sublanes, ~free) -> mask -> select.
                    keep = jnp.broadcast_to(sel_ref[c:c + 1, :], blk) != 0.0
                    ant = jnp.where(keep, x_ref[:, c:c + 1], ant)
                rules = ant if rules is None else rules * ant
            out_ref[...] = rules.astype(out_ref.dtype)

        out = pl.pallas_call(
            kernel,
            out_shape=jax.ShapeDtypeStruct((B, Rp), jnp.float32),
            grid_spec=pltpu.PrefetchScalarGridSpec(
                num_scalar_prefetch=0,
                grid=grid,
                in_specs=[
                    pl.BlockSpec((TB, V * M), lambda i, j: (i, 0)),   # x tile
                    pl.BlockSpec((V * M, TR), lambda i, j: (0, j)),   # selector tile
                ],
                out_specs=pl.BlockSpec((TB, TR), lambda i, j: (i, j)),
            ),
            compiler_params=pltpu.CompilerParams(
                dimension_semantics=("parallel", "parallel"),
                vmem_limit_bytes=48 * 1024 * 1024,   # v7x-safe (64 MiB physical)
            ),
        )(x2, sel)

        # Only pay the slice when R is not already lane-aligned; prefer R % 128 == 0.
        return out if Rp == R else out[:, :R]

    return jax.jit(forward)


def antecedent_ref(x, mf_indices):
    """Pure-JAX reference matching the PyTorch gather + prod exactly."""
    V = x.shape[1]
    ants = x[:, jnp.arange(V)[None, :], mf_indices]   # (B, R, V)
    return jnp.prod(ants, axis=2)                     # (B, R)


if __name__ == "__main__":
    key = jax.random.PRNGKey(0)
    k1, k2 = jax.random.split(key)

    # Case 1: 8 input variables x 2 MFs -> R = 256 rules (lane-aligned, no slice).
    # Small tiles forced so the 2-D grid really runs multiple steps in both axes,
    # including a partial batch tail (B=20 with TB=8 -> grid (3, 2)).
    B1, V1, M1 = 20, 8, 2
    idx1 = np.asarray(list(itertools.product(*[range(M1)] * V1)), dtype=np.int32)
    x1 = jax.random.uniform(k1, (B1, V1, M1), jnp.float32, minval=0.05, maxval=1.0)
    fwd1 = make_antecedent_layer(idx1, M1, batch_tile=8, rule_tile=128)
    out1 = jax.block_until_ready(fwd1(x1))
    ref1 = antecedent_ref(x1, jnp.asarray(idx1))
    assert out1.shape == (B1, idx1.shape[0])
    np.testing.assert_allclose(np.asarray(out1), np.asarray(ref1), rtol=1e-5, atol=1e-6)

    # Case 2: classic ANFIS demo — 3 variables x 4 MFs -> R = 64 (< 128), exercises
    # the padded-rule / slice path with the default tile sizes.
    B2, V2, M2 = 8, 3, 4
    idx2 = np.asarray(list(itertools.product(*[range(M2)] * V2)), dtype=np.int32)
    x2 = jax.random.uniform(k2, (B2, V2, M2), jnp.float32, minval=0.05, maxval=1.0)
    fwd2 = make_antecedent_layer(idx2, M2)
    out2 = jax.block_until_ready(fwd2(x2))
    ref2 = antecedent_ref(x2, jnp.asarray(idx2))
    assert out2.shape == (B2, idx2.shape[0])
    np.testing.assert_allclose(np.asarray(out2), np.asarray(ref2), rtol=1e-5, atol=1e-6)

    print("KERNEL_OK")
</pallas_src>

<mosaic_0001>
module attributes {stable_mosaic.version = 11 : i64} {
  func.func @kernel(%arg0: i32, %arg1: i32, %arg2: memref<8x16xf32, #tpu.memory_space<vmem>>, %arg3: memref<16x128xf32, #tpu.memory_space<vmem>>, %arg4: memref<8x128xf32, #tpu.memory_space<vmem>>) attributes {dimension_semantics = [#tpu.dimension_semantics<parallel>, #tpu.dimension_semantics<parallel>], iteration_bounds = array<i64: 3, 2>, scalar_prefetch = 0 : i64, scratch_operands = 0 : i64, tpu.core_type = #tpu.core_type<tc>, window_params = [{transform_indices = @transform_0, window_bounds = array<i64: 8, 16>}, {transform_indices = @transform_1, window_bounds = array<i64: 16, 128>}, {transform_indices = @transform_2, window_bounds = array<i64: 8, 128>}]} {
    %c0 = arith.constant 0 : index
    %c0_0 = arith.constant 0 : index
    %0 = vector.load %arg2[%c0, %c0_0] : memref<8x16xf32, #tpu.memory_space<vmem>>, vector<8x1xf32>
    %1 = vector.shape_cast %0 : vector<8x1xf32> to vector<8x1xf32>
    %2 = vector.broadcast %1 : vector<8x1xf32> to vector<8x128xf32>
    %c1 = arith.constant 1 : index
    %c0_1 = arith.constant 0 : index
    %3 = vector.load %arg3[%c1, %c0_1] : memref<16x128xf32, #tpu.memory_space<vmem>>, vector<1x128xf32>
    %4 = vector.shape_cast %3 : vector<1x128xf32> to vector<1x128xf32>
    %5 = vector.broadcast %4 : vector<1x128xf32> to vector<8x128xf32>
    %cst = arith.constant 0.000000e+00 : f32
    %6 = vector.broadcast %cst : f32 to vector<8x128xf32>
    %7 = arith.cmpf one, %5, %6 : vector<8x128xf32>
    %c0_2 = arith.constant 0 : index
    %c1_3 = arith.constant 1 : index
    %8 = vector.load %arg2[%c0_2, %c1_3] : memref<8x16xf32, #tpu.memory_space<vmem>>, vector<8x1xf32>
    %9 = vector.shape_cast %8 : vector<8x1xf32> to vector<8x1xf32>
    %10 = vector.broadcast %9 : vector<8x1xf32> to vector<8x128xf32>
    %11 = arith.select %7, %10, %2 : vector<8x128xi1>, vector<8x128xf32>
    %c0_4 = arith.constant 0 : index
    %c2 = arith.constant 2 : index
    %12 = vector.load %arg2[%c0_4, %c2] : memref<8x16xf32, #tpu.memory_space<vmem>>, vector<8x1xf32>
    %13 = vector.shape_cast %12 : vector<8x1xf32> to vector<8x1xf32>
    %14 = vector.broadcast %13 : vector<8x1xf32> to vector<8x128xf32>
    %c3 = arith.constant 3 : index
    %c0_5 = arith.constant 0 : index
    %15 = vector.load %arg3[%c3, %c0_5] : memref<16x128xf32, #tpu.memory_space<vmem>>, vector<1x128xf32>
    %16 = vector.shape_cast %15 : vector<1x128xf32> to vector<1x128xf32>
    %17 = vector.broadcast %16 : vector<1x128xf32> to vector<8x128xf32>
    %cst_6 = arith.constant 0.000000e+00 : f32
    %18 = vector.broadcast %cst_6 : f32 to vector<8x128xf32>
    %19 = arith.cmpf one, %17, %18 : vector<8x128xf32>
    %c0_7 = arith.constant 0 : index
    %c3_8 = arith.constant 3 : index
    %20 = vector.load %arg2[%c0_7, %c3_8] : memref<8x16xf32, #tpu.memory_space<vmem>>, vector<8x1xf32>
    %21 = vector.shape_cast %20 : vector<8x1xf32> to vector<8x1xf32>
    %22 = vector.broadcast %21 : vector<8x1xf32> to vector<8x128xf32>
    %23 = arith.select %19, %22, %14 : vector<8x128xi1>, vector<8x128xf32>
    %24 = arith.mulf %11, %23 : vector<8x128xf32>
    %c0_9 = arith.constant 0 : index
    %c4 = arith.constant 4 : index
    %25 = vector.load %arg2[%c0_9, %c4] : memref<8x16xf32, #tpu.memory_space<vmem>>, vector<8x1xf32>
    %26 = vector.shape_cast %25 : vector<8x1xf32> to vector<8x1xf32>
    %27 = vector.broadcast %26 : vector<8x1xf32> to vector<8x128xf32>
    %c5 = arith.constant 5 : index
    %c0_10 = arith.constant 0 : index
    %28 = vector.load %arg3[%c5, %c0_10] : memref<16x128xf32, #tpu.memory_space<vmem>>, vector<1x128xf32>
    %29 = vector.shape_cast %28 : vector<1x128xf32> to vector<1x128xf32>
    %30 = vector.broadcast %29 : vector<1x128xf32> to vector<8x128xf32>
    %cst_11 = arith.constant 0.000000e+00 : f32
    %31 = vector.broadcast %cst_11 : f32 to vector<8x128xf32>
    %32 = arith.cmpf one, %30, %31 : vector<8x128xf32>
    %c0_12 = arith.constant 0 : index
    %c5_13 = arith.constant 5 : index
    %33 = vector.load %arg2[%c0_12, %c5_13] : memref<8x16xf32, #tpu.memory_space<vmem>>, vector<8x1xf32>
    %34 = vector.shape_cast %33 : vector<8x1xf32> to vector<8x1xf32>
    %35 = vector.broadcast %34 : vector<8x1xf32> to vector<8x128xf32>
    %36 = arith.select %32, %35, %27 : vector<8x128xi1>, vector<8x128xf32>
    %37 = arith.mulf %24, %36 : vector<8x128xf32>
    %c0_14 = arith.constant 0 : index
    %c6 = arith.constant 6 : index
    %38 = vector.load %arg2[%c0_14, %c6] : memref<8x16xf32, #tpu.memory_space<vmem>>, vector<8x1xf32>
    %39 = vector.shape_cast %38 : vector<8x1xf32> to vector<8x1xf32>
    %40 = vector.broadcast %39 : vector<8x1xf32> to vector<8x128xf32>
    %c7 = arith.constant 7 : index
    %c0_15 = arith.constant 0 : index
    %41 = vector.load %arg3[%c7, %c0_15] : memref<16x128xf32, #tpu.memory_space<vmem>>, vector<1x128xf32>
    %42 = vector.shape_cast %41 : vector<1x128xf32> to vector<1x128xf32>
    %43 = vector.broadcast %42 : vector<1x128xf32> to vector<8x128xf32>
    %cst_16 = arith.constant 0.000000e+00 : f32
    %44 = vector.broadcast %cst_16 : f32 to vector<8x128xf32>
    %45 = arith.cmpf one, %43, %44 : vector<8x128xf32>
    %c0_17 = arith.constant 0 : index
    %c7_18 = arith.constant 7 : index
    %46 = vector.load %arg2[%c0_17, %c7_18] : memref<8x16xf32, #tpu.memory_space<vmem>>, vector<8x1xf32>
    %47 = vector.shape_cast %46 : vector<8x1xf32> to vector<8x1xf32>
    %48 = vector.broadcast %47 : vector<8x1xf32> to vector<8x128xf32>
    %49 = arith.select %45, %48, %40 : vector<8x128xi1>, vector<8x128xf32>
    %50 = arith.mulf %37, %49 : vector<8x128xf32>
    %c0_19 = arith.constant 0 : index
    %c8 = arith.constant 8 : index
    %51 = vector.load %arg2[%c0_19, %c8] : memref<8x16xf32, #tpu.memory_space<vmem>>, vector<8x1xf32>
    %52 = vector.shape_cast %51 : vector<8x1xf32> to vector<8x1xf32>
    %53 = vector.broadcast %52 : vector<8x1xf32> to vector<8x128xf32>
    %c9 = arith.constant 9 : index
    %c0_20 = arith.constant 0 : index
    %54 = vector.load %arg3[%c9, %c0_20] : memref<16x128xf32, #tpu.memory_space<vmem>>, vector<1x128xf32>
    %55 = vector.shape_cast %54 : vector<1x128xf32> to vector<1x128xf32>
    %56 = vector.broadcast %55 : vector<1x128xf32> to vector<8x128xf32>
    %cst_21 = arith.constant 0.000000e+00 : f32
    %57 = vector.broadcast %cst_21 : f32 to vector<8x128xf32>
    %58 = arith.cmpf one, %56, %57 : vector<8x128xf32>
    %c0_22 = arith.constant 0 : index
    %c9_23 = arith.constant 9 : index
    %59 = vector.load %arg2[%c0_22, %c9_23] : memref<8x16xf32, #tpu.memory_space<vmem>>, vector<8x1xf32>
    %60 = vector.shape_cast %59 : vector<8x1xf32> to vector<8x1xf32>
    %61 = vector.broadcast %60 : vector<8x1xf32> to vector<8x128xf32>
    %62 = arith.select %58, %61, %53 : vector<8x128xi1>, vector<8x128xf32>
    %63 = arith.mulf %50, %62 : vector<8x128xf32>
    %c0_24 = arith.constant 0 : index
    %c10 = arith.constant 10 : index
    %64 = vector.load %arg2[%c0_24, %c10] : memref<8x16xf32, #tpu.memory_space<vmem>>, vector<8x1xf32>
    %65 = vector.shape_cast %64 : vector<8x1xf32> to vector<8x1xf32>
    %66 = vector.broadcast %65 : vector<8x1xf32> to vector<8x128xf32>
    %c11 = arith.constant 11 : index
    %c0_25 = arith.constant 0 : index
    %67 = vector.load %arg3[%c11, %c0_25] : memref<16x128xf32, #tpu.memory_space<vmem>>, vector<1x128xf32>
    %68 = vector.shape_cast %67 : vector<1x128xf32> to vector<1x128xf32>
    %69 = vector.broadcast %68 : vector<1x128xf32> to vector<8x128xf32>
    %cst_26 = arith.constant 0.000000e+00 : f32
    %70 = vector.broadcast %cst_26 : f32 to vector<8x128xf32>
    %71 = arith.cmpf one, %69, %70 : vector<8x128xf32>
    %c0_27 = arith.constant 0 : index
    %c11_28 = arith.constant 11 : index
    %72 = vector.load %arg2[%c0_27, %c11_28] : memref<8x16xf32, #tpu.memory_space<vmem>>, vector<8x1xf32>
    %73 = vector.shape_cast %72 : vector<8x1xf32> to vector<8x1xf32>
    %74 = vector.broadcast %73 : vector<8x1xf32> to vector<8x128xf32>
    %75 = arith.select %71, %74, %66 : vector<8x128xi1>, vector<8x128xf32>
    %76 = arith.mulf %63, %75 : vector<8x128xf32>
    %c0_29 = arith.constant 0 : index
    %c12 = arith.constant 12 : index
    %77 = vector.load %arg2[%c0_29, %c12] : memref<8x16xf32, #tpu.memory_space<vmem>>, vector<8x1xf32>
    %78 = vector.shape_cast %77 : vector<8x1xf32> to vector<8x1xf32>
    %79 = vector.broadcast %78 : vector<8x1xf32> to vector<8x128xf32>
    %c13 = arith.constant 13 : index
    %c0_30 = arith.constant 0 : index
    %80 = vector.load %arg3[%c13, %c0_30] : memref<16x128xf32, #tpu.memory_space<vmem>>, vector<1x128xf32>
    %81 = vector.shape_cast %80 : vector<1x128xf32> to vector<1x128xf32>
    %82 = vector.broadcast %81 : vector<1x128xf32> to vector<8x128xf32>
    %cst_31 = arith.constant 0.000000e+00 : f32
    %83 = vector.broadcast %cst_31 : f32 to vector<8x128xf32>
    %84 = arith.cmpf one, %82, %83 : vector<8x128xf32>
    %c0_32 = arith.constant 0 : index
    %c13_33 = arith.constant 13 : index
    %85 = vector.load %arg2[%c0_32, %c13_33] : memref<8x16xf32, #tpu.memory_space<vmem>>, vector<8x1xf32>
    %86 = vector.shape_cast %85 : vector<8x1xf32> to vector<8x1xf32>
    %87 = vector.broadcast %86 : vector<8x1xf32> to vector<8x128xf32>
    %88 = arith.select %84, %87, %79 : vector<8x128xi1>, vector<8x128xf32>
    %89 = arith.mulf %76, %88 : vector<8x128xf32>
    %c0_34 = arith.constant 0 : index
    %c14 = arith.constant 14 : index
    %90 = vector.load %arg2[%c0_34, %c14] : memref<8x16xf32, #tpu.memory_space<vmem>>, vector<8x1xf32>
    %91 = vector.shape_cast %90 : vector<8x1xf32> to vector<8x1xf32>
    %92 = vector.broadcast %91 : vector<8x1xf32> to vector<8x128xf32>
    %c15 = arith.constant 15 : index
    %c0_35 = arith.constant 0 : index
    %93 = vector.load %arg3[%c15, %c0_35] : memref<16x128xf32, #tpu.memory_space<vmem>>, vector<1x128xf32>
    %94 = vector.shape_cast %93 : vector<1x128xf32> to vector<1x128xf32>
    %95 = vector.broadcast %94 : vector<1x128xf32> to vector<8x128xf32>
    %cst_36 = arith.constant 0.000000e+00 : f32
    %96 = vector.broadcast %cst_36 : f32 to vector<8x128xf32>
    %97 = arith.cmpf one, %95, %96 : vector<8x128xf32>
    %c0_37 = arith.constant 0 : index
    %c15_38 = arith.constant 15 : index
    %98 = vector.load %arg2[%c0_37, %c15_38] : memref<8x16xf32, #tpu.memory_space<vmem>>, vector<8x1xf32>
    %99 = vector.shape_cast %98 : vector<8x1xf32> to vector<8x1xf32>
    %100 = vector.broadcast %99 : vector<8x1xf32> to vector<8x128xf32>
    %101 = arith.select %97, %100, %92 : vector<8x128xi1>, vector<8x128xf32>
    %102 = arith.mulf %89, %101 : vector<8x128xf32>
    %c0_39 = arith.constant 0 : index
    %c0_40 = arith.constant 0 : index
    %103 = vector.load %arg4[%c0_39, %c0_40] : memref<8x128xf32, #tpu.memory_space<vmem>>, vector<8x128xf32>
    tpu.vector_store %arg4[%c0_39, %c0_40], %102 {strides = array<i32>} : memref<8x128xf32, #tpu.memory_space<vmem>>, vector<8x128xf32>,
    return
  }
  func.func @transform_0(%arg0: i32, %arg1: i32) -> (i32, i32) {
    %c0_i32 = arith.constant 0 : i32
    %c0_i32_0 = arith.constant 0 : i32
    return %arg0, %c0_i32 : i32, i32
  }
  func.func @transform_1(%arg0: i32, %arg1: i32) -> (i32, i32) {
    %c0_i32 = arith.constant 0 : i32
    %c0_i32_0 = arith.constant 0 : i32
    return %c0_i32, %arg1 : i32, i32
  }
  func.func @transform_2(%arg0: i32, %arg1: i32) -> (i32, i32) {
    %c0_i32 = arith.constant 0 : i32
    return %arg0, %arg1 : i32, i32
  }
}

</mosaic_0001>

<llo_original>
// kernel: forward.1
$region0: #{forward.1}
  #allocation0 [shape = 'u32[]', space=smem, size = 0x4, offset = 0x4, fixed_abs, tag = 'smem constant byte address 0x4 - core index']
  #allocation1 [shape = 'u32[144,128]{1,0:T(1,128)}', space=vmem, size = 0x12000, scoped, tag = 'internal scratch']
  %s0 = inlined_call_operand.vmem [shape: f32[20,16], index: 0, kind: input, shape index: {}]
  %s1 = inlined_call_operand.vmem [shape: f32[16,256], index: 1, kind: input, shape index: {}]
  %s2 = inlined_call_operand.hbm [shape: f32[20,256], index: 2, kind: output, shape index: {}]
  %s3 = sld [smem:[#allocation0]]
  $region79: #{forward.1} parent=0
    _
  %s5 = ssub.s32 1, %s3
  %s6 = scalar_select 0, %s5, %s3
  $region1: #{forward.1} parent=0
    #allocation2 [shape = 'u8[16384]{0}', space=vmem, size = 0x4000, scoped, tag = 'input window, operand 1']
    #allocation3 [shape = 'u8[8192]{0}', space=vmem, size = 0x2000, scoped, tag = 'output window, operand 0']
    #allocation4 [shape = 's32[2]{0}', space=sflag, size = 0x8, scoped, tag = 'scoped memory for forward.1']
    %7 = vsyncpa [#allocation4], 0
    %s8 = scalar_lea.sflag [#allocation4], 1
    %9 = vsyncpa %s8, 0
    loop: start=0, step=1, limit=8
    $region2: #{forward.1} parent=1 // loop_pre_header
      _
    $region3: #{forward.1} parent=1 // loop_header
      %s11 = sphi 0, %s15
      %p12 = scmp.ge.s32.totalorder %s11, 8
      %s18 = sphi 0, %s30
      %s19 = sphi 0, %s26
      %s20 = sphi 0, %s18
      %s21 = sphi 0, %s19
      %s22 = sphi 0, %s20
      %s23 = sphi 0, %s21
      %s33 = sphi 0, %s35
      %s36 = sphi 0, %s33
      %s37 = sphi 0, %s36
      %s53 = sphi 0, %s37
      %s59 = sphi 0, %s61
      %s62 = sphi 0, %s59
      %s63 = sphi 0, %s62
      %s79 = sphi 0, %s63
      %s87 = sphi 0, %s89
      %s90 = sphi 0, %s87
      %s91 = sphi 0, %s90
      %s107 = sphi 0, %s91
    $region4: #{forward.1} parent=1 // loop_header_branch
      %14 = sbr.rel (%p12) target = $region8
    $region5: #{forward.1} parent=1 // loop_body
      %s16 = ssub.s32 %s11, 1
      %s17 = ssub.s32 %s11, 2
      %s24 = sadd.s32 1, %s19
      %p25 = scmp.ge.s32.totalorder %s24, 2
      %s26 = scalar_select %p25, 0, %s24
      %s27 = sadd.s32 1, %s18
      %s28 = scalar_select %p25, %s27, %s18
      %p29 = scmp.ge.s32.totalorder %s28, 3
      %s30 = scalar_select %p29, 0, %s28
      %s31 = ssub.s32 %s18, %s30
      %p32 = scmp.eq.s32.totalorder %s31, 0
      %s34 = sadd.s32 %s33, 1
      %s35 = scalar_select %p32, %s33, %s34
      %p38 = pneg %p32
      %p39 = scmp.eq.s32.totalorder %s11, 5
      %p40 = por %p38, %p39
      %p41 = scmp.ne.s32.totalorder %s33, %s36
      %p42 = scmp.eq.s32.totalorder %s11, 0
      %p43 = por %p41, %p42
      %p44 = scmp.ne.s32.totalorder %s33, %s36
      %p45 = scmp.eq.s32.totalorder %s16, 5
      %p46 = por %p44, %p45
      %p47 = scmp.ne.s32.totalorder %s36, %s37
      %p48 = scmp.eq.s32.totalorder %s16, 0
      %p49 = por %p47, %p48
      %p50 = scmp.ne.s32.totalorder %s36, %s37
      %p51 = scmp.eq.s32.totalorder %s17, 5
      %p52 = por %p50, %p51
      %p54 = scmp.ne.s32.totalorder %s37, %s53
      %p55 = scmp.eq.s32.totalorder %s17, 0
      %p56 = por %p54, %p55
      %s57 = ssub.s32 %s19, %s26
      %p58 = scmp.eq.s32.totalorder %s57, 0
      %s60 = sadd.s32 %s59, 1
      %s61 = scalar_select %p58, %s59, %s60
      %p64 = pneg %p58
      %p65 = scmp.eq.s32.totalorder %s11, 5
      %p66 = por %p64, %p65
      %p67 = scmp.ne.s32.totalorder %s59, %s62
      %p68 = scmp.eq.s32.totalorder %s11, 0
      %p69 = por %p67, %p68
      %p70 = scmp.ne.s32.totalorder %s59, %s62
      %p71 = scmp.eq.s32.totalorder %s16, 5
      %p72 = por %p70, %p71
      %p73 = scmp.ne.s32.totalorder %s62, %s63
      %p74 = scmp.eq.s32.totalorder %s16, 0
      %p75 = por %p73, %p74
      %p76 = scmp.ne.s32.totalorder %s62, %s63
      %p77 = scmp.eq.s32.totalorder %s17, 5
      %p78 = por %p76, %p77
      %p80 = scmp.ne.s32.totalorder %s63, %s79
      %p81 = scmp.eq.s32.totalorder %s17, 0
      %p82 = por %p80, %p81
      %s83 = ssub.s32 %s18, %s30
      %s84 = ssub.s32 %s19, %s26
      %s85 = sor.u32 %s83, %s84
      %p86 = scmp.eq.s32.totalorder %s85, 0
      %s88 = sadd.s32 %s87, 1
      %s89 = scalar_select %p86, %s87, %s88
      %p92 = pneg %p86
      %p93 = scmp.eq.s32.totalorder %s11, 5
      %p94 = por %p92, %p93
      %p95 = scmp.ne.s32.totalorder %s87, %s90
      %p96 = scmp.eq.s32.totalorder %s11, 0
      %p97 = por %p95, %p96
      %p98 = scmp.ne.s32.totalorder %s87, %s90
      %p99 = scmp.eq.s32.totalorder %s16, 5
      %p100 = por %p98, %p99
      %p101 = scmp.ne.s32.totalorder %s90, %s91
      %p102 = scmp.eq.s32.totalorder %s16, 0
      %p103 = por %p101, %p102
      %p104 = scmp.ne.s32.totalorder %s90, %s91
      %p105 = scmp.eq.s32.totalorder %s17, 5
      %p106 = por %p104, %p105
      %p108 = scmp.ne.s32.totalorder %s91, %s107
      %p109 = scmp.eq.s32.totalorder %s17, 0
      %p110 = por %p108, %p109
      %p111 = scmp.le.s32.totalorder 1, %s11
      %p112 = scmp.lt.s32.totalorder %s11, 7
      %p113 = pnand %p111, %p112
      %p114 = pneg %p113
      // Predicated region
      $region9: #{forward.1} parent=5 // pred_check
        _
      $region10: #{forward.1} parent=5 // pred_check_branch
        %116 = sbr.rel (%p113) target = $region12
      $region11: #{forward.1} parent=5 // pred_region
        %s117 = ssub.s32 %s11, 1
      $region12: #{forward.1} parent=5 // pred_fallthru
        _
      %p118 = scmp.lt.s32.totalorder %s11, 6
      // Predicated region
      $region13: #{forward.1} parent=5 // pred_check
        %p119 = pneg %p118
      $region14: #{forward.1} parent=5 // pred_check_branch
        %121 = sbr.rel (%p119) target = $region16
      $region15: #{forward.1} parent=5 // pred_region
        // Predicated region
        $region17: #{forward.1} parent=15 // pred_check
          %p122 = pneg %p43
        $region18: #{forward.1} parent=15 // pred_check_branch
          %124 = sbr.rel (%p122) target = $region20
        $region19: #{forward.1} parent=15 // pred_region
          %p125 = scmp.lt.s32.totalorder %s18, 2
          %s126 = scalar_select %p125, %s18, 2
          %s127 = smul.addr %s126, 8
          %s128 = scalar_lea.vmem %s0, %s127
        $region20: #{forward.1} parent=15 // pred_fallthru
          _
        // Predicated region
        $region21: #{forward.1} parent=15 // pred_check
          %p129 = pneg %p69
        $region22: #{forward.1} parent=15 // pred_check_branch
          %131 = sbr.rel (%p129) target = $region24
        $region23: #{forward.1} parent=15 // pred_region
          %s132 = sand.u32 %s59, 1
          %s133 = sand.u32 %s59, 1
          %s134 = smul.addr %s133, 16
          %s135 = scalar_lea.vmem [#allocation2], %s134
          %s136 = smul.addr %s19, 8
          %s137 = scalar_lea.vmem %s1, %s136
          // Predicated region
          $region25: #{forward.1} parent=23 // pred_check
            _
          $region26: #{forward.1} parent=23 // pred_check_branch
            %139 = sbr.rel (0) target = $region28
          $region27: #{forward.1} parent=23 // pred_region
            // Predicated region
            $region29: #{forward.1} parent=27 // pred_check
              _
            $region30: #{forward.1} parent=27 // pred_check_branch
              %141 = sbr.rel (0) target = $region32
            $region31: #{forward.1} parent=27 // pred_region
              // Predicated region
              $region44: #{forward.1} parent=31 // pred_check
                _
              $region45: #{forward.1} parent=31 // pred_check_branch
                %159 = sbr.rel (0) target = $region47
              $region46: #{forward.1} parent=31 // pred_region
                loop: start=0, step=1, limit=1
                $region48: #{forward.1} parent=46 // loop_pre_header
                  _
                $region49: #{forward.1} parent=46 // loop_header
                  %s161 = sphi 0, %s165
                  %p162 = scmp.ge.s32.totalorder %s161, 1
                  %s166 = sphi %s137, %s137
                  %s167 = sphi %s135, %s135
                $region50: #{forward.1} parent=46 // loop_header_branch
                  %164 = sbr.rel (%p162) target = $region54
                $region51: #{forward.1} parent=46 // loop_body
                  %v168 = vld [vmem:[%s166] sm:$0xff]
                  %169 = vst [vmem:[%s167] sm:$0xff] %v168
                  %v170 = vld [vmem:[%s166 + $0x10] sm:$0xff]
                  %171 = vst [vmem:[%s167 + $0x8] sm:$0xff] %v170
                $region52: #{forward.1} parent=46 // loop_footer
                  %s165 = sadd.s32 1, %s161
                $region53: #{forward.1} parent=46 // loop_footer_branch
                  %160 = sbr.rel target = $region49
                $region54: #{forward.1} parent=46 // loop_exit
                  _
              $region47: #{forward.1} parent=31 // pred_fallthru
                _
              // Predicated region
              $region55: #{forward.1} parent=31 // pred_check
                _
              $region56: #{forward.1} parent=31 // pred_check_branch
                %173 = sbr.rel target = $region58
              $region57: #{forward.1} parent=31 // pred_region
                _
              $region58: #{forward.1} parent=31 // pred_fallthru
                _
            $region32: #{forward.1} parent=27 // pred_fallthru
              _
            // Predicated region
            $region33: #{forward.1} parent=27 // pred_check
              _
            $region34: #{forward.1} parent=27 // pred_check_branch
              %143 = sbr.rel target = $region36
            $region35: #{forward.1} parent=27 // pred_region
              %s145 = ssub.s32 256, 1
              loop: start=0, step=1, limit=1
              $region37: #{forward.1} parent=35 // loop_pre_header
                _
              $region38: #{forward.1} parent=35 // loop_header
                %s147 = sphi 0, %s151
                %p148 = scmp.ge.s32.totalorder %s147, 1
                %s152 = sphi %s137, %s137
                %s153 = sphi %s135, %s135
              $region39: #{forward.1} parent=35 // loop_header_branch
                %150 = sbr.rel (%p148) target = $region43
              $region40: #{forward.1} parent=35 // loop_body
                %v154 = vld [vmem:[%s152] sm:%s145]
                %155 = vst [vmem:[%s153] sm:%s145] %v154
                %v156 = vld [vmem:[%s152 + $0x10] sm:%s145]
                %157 = vst [vmem:[%s153 + $0x8] sm:%s145] %v156
              $region41: #{forward.1} parent=35 // loop_footer
                %s151 = sadd.s32 1, %s147
              $region42: #{forward.1} parent=35 // loop_footer_branch
                %146 = sbr.rel target = $region38
              $region43: #{forward.1} parent=35 // loop_exit
                _
            $region36: #{forward.1} parent=27 // pred_fallthru
              _
          $region28: #{forward.1} parent=23 // pred_fallthru
            _
          %174 = vnop
        $region24: #{forward.1} parent=15 // pred_fallthru
          _
      $region16: #{forward.1} parent=5 // pred_fallthru
        _
      %p175 = scmp.le.s32.totalorder 1, %s11
      %p176 = scmp.lt.s32.totalorder %s11, 7
      %p177 = pnand %p175, %p176
      %p178 = pneg %p177
      // Predicated region
      $region59: #{forward.1} parent=5 // pred_check
        _
      $region60: #{forward.1} parent=5 // pred_check_branch
        %180 = sbr.rel (%p177) target = $region62
      $region61: #{forward.1} parent=5 // pred_region
        %s181 = ssub.s32 %s11, 1
        %s182 = sand.u32 %s62, 1
        %s183 = sand.u32 %s62, 1
        %s184 = smul.addr %s183, 16
        %s185 = scalar_lea.vmem [#allocation2], %s184
        // Predicated region
        $region63: #{forward.1} parent=61 // pred_check
          %p186 = pneg %p75
        $region64: #{forward.1} parent=61 // pred_check_branch
          %188 = sbr.rel (%p186) target = $region66
        $region65: #{forward.1} parent=61 // pred_region
          _
        $region66: #{forward.1} parent=61 // pred_fallthru
          _
        %p189 = scmp.lt.s32.totalorder %s20, 2
        %s190 = scalar_select %p189, %s20, 2
        %s191 = smul.addr %s190, 8
        %s192 = scalar_lea.vmem %s0, %s191
        %p193 = pneg %p49
        %p194 = pneg %p46
        %s195 = sand.u32 %s62, 1
        %s196 = sand.u32 %s62, 1
        %s197 = smul.addr %s196, 16
        %s198 = scalar_lea.vmem [#allocation2], %s197
        %p199 = pneg %p75
        %p200 = pneg %p72
        %p201 = pneg %p103
        %p202 = pneg %p100
        %s203 = sand.u32 %s90, 1
        %s204 = scalar_lea.sflag [#allocation4], %s203
        %s205 = sand.u32 %s90, 1
        %s206 = smul.addr %s205, 8
        %s207 = scalar_lea.vmem [#allocation3], %s206
        %p208 = scmp.lt.s32.totalorder %s20, 2
        %s209 = scalar_select %p208, %s20, 2
        %s210 = smul.addr %s209, 8
        %s211 = scalar_lea.vmem %s0, %s210
        %v212 = vld [vmem:[%s211] sm:$0xff]
        %214 = vset.pattern.permute.xlu0 0
        %215 = vperm.xlu0 %214, %v212
        %v216 = vpop.permute.xlu0 %215
        %v218 = vld [vmem:[%s185 + $0x1] sm:$0x1]
        %v219 = vlaneseq
        %v220 = vshrl.u32 %v219, 7
        %v221 = vsub.s32 0, %v220
        %v222 = vrot.slane %v218, %v221
        %vm223 = vcmp.ne.f32.partialorder %v222, 0.0
        %224 = vset.pattern.permute.xlu0 1
        %225 = vperm.xlu0 %224, %v212
        %v226 = vpop.permute.xlu0 %225
        %v228 = vsel %vm223, %v226, %v216
        %229 = vset.pattern.permute.xlu0 2
        %230 = vperm.xlu0 %229, %v212
        %v231 = vpop.permute.xlu0 %230
        %v233 = vld [vmem:[%s185 + $0x3] sm:$0x1]
        %v234 = vlaneseq
        %v235 = vshrl.u32 %v234, 7
        %v236 = vsub.s32 0, %v235
        %v237 = vrot.slane %v233, %v236
        %vm238 = vcmp.ne.f32.partialorder %v237, 0.0
        %239 = vset.pattern.permute.xlu0 3
        %240 = vperm.xlu0 %239, %v212
        %v241 = vpop.permute.xlu0 %240
        %v243 = vsel %vm238, %v241, %v231
        %v244 = vmul.f32 %v228, %v243
        %245 = vset.pattern.permute.xlu0 4
        %246 = vperm.xlu0 %245, %v212
        %v247 = vpop.permute.xlu0 %246
        %v249 = vld [vmem:[%s185 + $0x5] sm:$0x1]
        %v250 = vlaneseq
        %v251 = vshrl.u32 %v250, 7
        %v252 = vsub.s32 0, %v251
        %v253 = vrot.slane %v249, %v252
        %vm254 = vcmp.ne.f32.partialorder %v253, 0.0
        %255 = vset.pattern.permute.xlu0 5
        %256 = vperm.xlu0 %255, %v212
        %v257 = vpop.permute.xlu0 %256
        %v259 = vsel %vm254, %v257, %v247
        %v260 = vmul.f32 %v244, %v259
        %261 = vset.pattern.permute.xlu0 6
        %262 = vperm.xlu0 %261, %v212
        %v263 = vpop.permute.xlu0 %262
        %v265 = vld [vmem:[%s185 + $0x7] sm:$0x1]
        %v266 = vlaneseq
        %v267 = vshrl.u32 %v266, 7
        %v268 = vsub.s32 0, %v267
        %v269 = vrot.slane %v265, %v268
        %vm270 = vcmp.ne.f32.partialorder %v269, 0.0
        %271 = vset.pattern.permute.xlu0 7
        %272 = vperm.xlu0 %271, %v212
        %v273 = vpop.permute.xlu0 %272
        %v275 = vsel %vm270, %v273, %v263
        %v276 = vmul.f32 %v260, %v275
        %277 = vset.pattern.permute.xlu0 8
        %278 = vperm.xlu0 %277, %v212
        %v279 = vpop.permute.xlu0 %278
        %v281 = vld [vmem:[%s185 + $0x9] sm:$0x1]
        %v282 = vlaneseq
        %v283 = vshrl.u32 %v282, 7
        %v284 = vsub.s32 0, %v283
        %v285 = vrot.slane %v281, %v284
        %vm286 = vcmp.ne.f32.partialorder %v285, 0.0
        %287 = vset.pattern.permute.xlu0 9
        %288 = vperm.xlu0 %287, %v212
        %v289 = vpop.permute.xlu0 %288
        %v291 = vsel %vm286, %v289, %v279
        %v292 = vmul.f32 %v276, %v291
        %293 = vset.pattern.permute.xlu0 10
        %294 = vperm.xlu0 %293, %v212
        %v295 = vpop.permute.xlu0 %294
        %v297 = vld [vmem:[%s185 + $0xb] sm:$0x1]
        %v298 = vlaneseq
        %v299 = vshrl.u32 %v298, 7
        %v300 = vsub.s32 0, %v299
        %v301 = vrot.slane %v297, %v300
        %vm302 = vcmp.ne.f32.partialorder %v301, 0.0
        %303 = vset.pattern.permute.xlu0 11
        %304 = vperm.xlu0 %303, %v212
        %v305 = vpop.permute.xlu0 %304
        %v307 = vsel %vm302, %v305, %v295
        %v308 = vmul.f32 %v292, %v307
        %309 = vset.pattern.permute.xlu0 12
        %310 = vperm.xlu0 %309, %v212
        %v311 = vpop.permute.xlu0 %310
        %v313 = vld [vmem:[%s185 + $0xd] sm:$0x1]
        %v314 = vlaneseq
        %v315 = vshrl.u32 %v314, 7
        %v316 = vsub.s32 0, %v315
        %v317 = vrot.slane %v313, %v316
        %vm318 = vcmp.ne.f32.partialorder %v317, 0.0
        %319 = vset.pattern.permute.xlu0 13
        %320 = vperm.xlu0 %319, %v212
        %v321 = vpop.permute.xlu0 %320
        %v323 = vsel %vm318, %v321, %v311
        %v324 = vmul.f32 %v308, %v323
        %325 = vset.pattern.permute.xlu0 14
        %326 = vperm.xlu0 %325, %v212
        %v327 = vpop.permute.xlu0 %326
        %v329 = vld [vmem:[%s185 + $0xf] sm:$0x1]
        %v330 = vlaneseq
        %v331 = vshrl.u32 %v330, 7
        %v332 = vsub.s32 0, %v331
        %v333 = vrot.slane %v329, %v332
        %vm334 = vcmp.ne.f32.partialorder %v333, 0.0
        %335 = vset.pattern.permute.xlu0 15
        %336 = vperm.xlu0 %335, %v212
        %v337 = vpop.permute.xlu0 %336
        %v339 = vsel %vm334, %v337, %v327
        %v340 = vmul.f32 %v324, %v339
        %341 = vst [vmem:[%s207] sm:$0xff] %v340
        %s342 = sand.u32 %s90, 1
        %s343 = scalar_lea.sflag [#allocation4], %s342
        %s344 = sand.u32 %s90, 1
        %s345 = smul.addr %s344, 8
        %s346 = scalar_lea.vmem [#allocation3], %s345
        // Predicated region
        $region67: #{forward.1} parent=61 // pred_check
          %p347 = pneg %p100
        $region68: #{forward.1} parent=61 // pred_check_branch
          %349 = sbr.rel (%p347) target = $region70
        $region69: #{forward.1} parent=61 // pred_region
          %s351 = ssub.s32 128, 128
          %352 = vsyncadd %s343, %s351
          %s353 = smul.addr %s20, 2
          %s354 = sadd.s32 %s21, %s353
          %s355 = smul.addr %s354, 128
          %s356 = scalar_lea.hbm %s2, %s355
          %s358 = sshll.u32 %s346, 4
          %s359 = int_to_ptr.vmem [resolvable:$true] %s358
          %361 = dma.vmem_to_hbm [thread:$0]  %s359, 128, %s356, %s343
        $region70: #{forward.1} parent=61 // pred_fallthru
          _
      $region62: #{forward.1} parent=5 // pred_fallthru
        _
      %p362 = scmp.le.s32.totalorder 2, %s11
      // Predicated region
      $region71: #{forward.1} parent=5 // pred_check
        %p363 = pneg %p362
      $region72: #{forward.1} parent=5 // pred_check_branch
        %365 = sbr.rel (%p363) target = $region74
      $region73: #{forward.1} parent=5 // pred_region
        %s366 = ssub.s32 %s11, 2
        // Predicated region
        $region75: #{forward.1} parent=73 // pred_check
          %p367 = pneg %p106
        $region76: #{forward.1} parent=73 // pred_check_branch
          %369 = sbr.rel (%p367) target = $region78
        $region77: #{forward.1} parent=73 // pred_region
          %s370 = sand.u32 %s91, 1
          %s371 = scalar_lea.sflag [#allocation4], %s370
          %s372 = sand.u32 %s91, 1
          %s373 = smul.addr %s372, 8
          %s374 = scalar_lea.vmem [#allocation3], %s373
          %375 = dma.done %s371, 128
        $region78: #{forward.1} parent=73 // pred_fallthru
          _
      $region74: #{forward.1} parent=5 // pred_fallthru
        _
    $region6: #{forward.1} parent=1 // loop_footer
      %s15 = sadd.s32 1, %s11
    $region7: #{forward.1} parent=1 // loop_footer_branch
      %10 = sbr.rel target = $region3
    $region8: #{forward.1} parent=1 // loop_exit
      _
    %376 = vsyncpa [#allocation4], 1
    %s377 = scalar_lea.sflag [#allocation4], 1
    %378 = vsyncpa %s377, 1

</llo_original>
